<compile_context>
chip_gen: v7x
topology: tpu7x:2x2x1
jax: 0.10.0
libtpu: 0.0.40
codegen_flags: <defaults>
</compile_context>

<pallas_src>
import functools

import jax
import jax.numpy as jnp
from jax.experimental import pallas as pl
from jax.experimental.pallas import tpu as pltpu


def part_group_kernel(x_ref, c_ref, ct_ref, csq_ref, invbeta_ref, invsig_ref,
                      out_ref, assign_ref, acc_qx, acc_sum, *, hw_valid, tile_hw):
    """One (batch, hw-tile) grid step.

    x_ref      : (1, ch, Thw)  f32/bf16  featmap tile (last tile may read OOB)
    c_ref      : (k, ch)       bf16      part centers (MXU operand)
    ct_ref     : (ch, k)       f32       (centers / sigma)^T, folded in wrapper
    csq_ref    : (k, 1)        f32       ||c_k||^2
    invbeta_ref: (k, 1)        f32       1 / sigmoid(smooth_factor)
    invsig_ref : (1, k)        f32       1 / sigma
    out_ref    : (1, ch, k)    f32       normalized outputs (written last tile)
    assign_ref : (1, k, Thw)   f32       softmax assignment tile
    acc_qx     : (ch, k)       f32       scratch: assign-weighted feature sums
    acc_sum    : (1, k)        f32       scratch: per-part assignment mass
    """
    t = pl.program_id(1)
    nt = pl.num_programs(1)

    @pl.when(t == 0)
    def _init():
        acc_qx[...] = jnp.zeros_like(acc_qx)
        acc_sum[...] = jnp.zeros_like(acc_sum)

    # Single in-kernel downcast for the MXU; featmaps may arrive f32 or bf16.
    x_bf = x_ref[0].astype(jnp.bfloat16)                      # (ch, Thw)

    if hw_valid % tile_hw != 0:
        # Ragged hw: the last block reads past the array bound; zero those
        # columns (handles arbitrary garbage, incl. NaN/Inf) and build the
        # validity row that keeps padded columns out of the assignment mass.
        col = jax.lax.broadcasted_iota(jnp.int32, (1, tile_hw), 1) + t * tile_hw
        valid = col < hw_valid
        x_bf = jnp.where(valid, x_bf, 0.0)
        mask_row = valid.astype(jnp.bfloat16)
    else:
        mask_row = jnp.ones((1, tile_hw), jnp.bfloat16)

    # Distance logits: single-pass bf16 MXU with f32 accumulation.
    cx = jnp.dot(c_ref[...], x_bf, preferred_element_type=jnp.float32)   # (k, Thw)
    xf = x_bf.astype(jnp.float32)            # transient: only feeds the square-reduce
    x_sq = jnp.sum(xf * xf, axis=0, keepdims=True)                       # (1, Thw)
    logits = jnp.minimum(2.0 * cx - x_sq - csq_ref[...], 0.0) * invbeta_ref[...]

    # Softmax over the part axis; approximate EUP reciprocal for the denominator.
    m = jnp.max(logits, axis=0, keepdims=True)
    e = jnp.exp(logits - m)
    assign = e * pl.reciprocal(jnp.sum(e, axis=0, keepdims=True), approx=True)
    assign_ref[0] = assign                                               # (k, Thw)

    # Accumulate qx^T = x . assign^T -> (ch, k) and the per-part mass, both as
    # single-pass bf16 MXU ops (default precision, f32 accumulators).  The big
    # operand stays un-transposed and the result is already in output layout.
    assign_bf = assign.astype(jnp.bfloat16)
    dn = (((1,), (1,)), ((), ()))
    acc_qx[...] += jax.lax.dot_general(x_bf, assign_bf, dn,
                                       preferred_element_type=jnp.float32)
    acc_sum[...] += jax.lax.dot_general(mask_row, assign_bf, dn,
                                        preferred_element_type=jnp.float32)

    @pl.when(t == nt - 1)
    def _finalize():
        inv_sum = 1.0 / jnp.maximum(acc_sum[...], 1e-5)                  # (1, k)
        out = acc_qx[...] * (inv_sum * invsig_ref[...]) - ct_ref[...]    # (ch, k)
        nrm2 = jnp.sum(out * out, axis=0, keepdims=True)                 # (1, k)
        out_ref[0] = out * jax.lax.rsqrt(jnp.maximum(nrm2, 1e-24))


def part_group_net(featmaps, part_centers, part_smooth_factors, *, max_tile=None):
    """featmaps (bs, ch, h, w) -> (outputs (bs, ch, k), assign (bs, k, h, w))."""
    bs, ch, h, w = featmaps.shape
    k = part_centers.shape[0]
    hw = h * w

    # ---- batch-invariant per-part quantities, hoisted out of the grid loop ----
    c = part_centers.astype(jnp.float32)
    beta = jax.nn.sigmoid(part_smooth_factors.astype(jnp.float32))       # (k,)
    inv_beta = (1.0 / beta).reshape(k, 1)
    c_sq = jnp.sum(c * c, axis=1, keepdims=True)                         # (k, 1)
    inv_sigma = (1.0 / jnp.sqrt(beta * 0.5)).reshape(1, k)               # (1, k)
    ct_scaled = c.T * inv_sigma                                          # (ch, k) = (c / sigma)^T
    c_bf = c.astype(jnp.bfloat16)

    # ---- budget-aware, balanced, lane-dense hw tiling ----
    try:
        vmem_cap = int(pltpu.get_tpu_info().vmem_capacity_bytes)
    except Exception:
        vmem_cap = 64 * 1024 * 1024          # v7x-sized safe fallback
    budget = vmem_cap // 2                   # leave headroom for compiler temps

    # Conservative linear VMEM model in thw: double-buffered f32 x tile +
    # double-buffered assign output + ~6 live f32 (k, thw) temporaries + one
    # transient f32 upcast of x; `fixed` covers accumulators + resident sides.
    per_col = 2 * ch * 4 + 2 * k * 4 + ch * 4 + 6 * k * 4 + 8
    fixed = ((ch + 1) * k * 4
             + 2 * (k * ch * 2 + ch * k * 4 + 3 * k * 4)
             + (64 << 10))
    cap = max(128, min(2048, (budget - fixed) // per_col // 128 * 128))
    if max_tile is not None:
        cap = min(cap, max(128, max_tile // 128 * 128))

    hw128 = ((hw + 127) // 128) * 128
    n_hw = (hw128 + cap - 1) // cap                        # number of hw tiles
    thw = ((hw128 + n_hw - 1) // n_hw + 127) // 128 * 128  # balanced, lane dense
    n_hw = (hw + thw - 1) // thw                           # grid extent over hw

    x = featmaps.reshape(bs, ch, hw)         # free reshape; dtype preserved

    est = fixed + per_col * thw
    vmem_limit = int(max(32 * 1024 * 1024, min((vmem_cap * 3) // 4, 2 * est)))

    kernel = functools.partial(part_group_kernel, hw_valid=hw, tile_hw=thw)

    # NOTE: on v7x with bs == 1 only the "parallel" batch axis exists, so one of
    # the two TensorCores idles; a future improvement is to split the hw axis
    # across cores with per-core partial accumulators and a tiny combine pass.
    out, assign = pl.pallas_call(
        kernel,
        out_shape=(jax.ShapeDtypeStruct((bs, ch, k), jnp.float32),
                   jax.ShapeDtypeStruct((bs, k, hw), jnp.float32)),
        grid_spec=pltpu.PrefetchScalarGridSpec(
            num_scalar_prefetch=0,
            grid=(bs, n_hw),
            in_specs=[
                pl.BlockSpec((1, ch, thw), lambda b, t: (b, 0, t)),
                pl.BlockSpec((k, ch), lambda b, t: (0, 0)),
                pl.BlockSpec((ch, k), lambda b, t: (0, 0)),
                pl.BlockSpec((k, 1), lambda b, t: (0, 0)),
                pl.BlockSpec((k, 1), lambda b, t: (0, 0)),
                pl.BlockSpec((1, k), lambda b, t: (0, 0)),
            ],
            out_specs=[
                pl.BlockSpec((1, ch, k), lambda b, t: (b, 0, 0)),
                pl.BlockSpec((1, k, thw), lambda b, t: (b, 0, t)),
            ],
            scratch_shapes=[
                pltpu.VMEM((ch, k), jnp.float32),
                pltpu.VMEM((1, k), jnp.float32),
            ],
        ),
        compiler_params=pltpu.CompilerParams(
            dimension_semantics=("parallel", "arbitrary"),
            vmem_limit_bytes=vmem_limit,
        ),
    )(x, c_bf, ct_scaled, c_sq, inv_beta, inv_sigma)

    return out, assign.reshape(bs, k, h, w)


def part_group_net_ref(featmaps, part_centers, part_smooth_factors):
    """Pure-JAX reference mirroring the PyTorch forward with the kernel's
    mixed-precision policy (bf16-rounded featmaps/centers/assign feed the
    matmuls; accumulation and everything else in f32)."""
    bs, ch, h, w = featmaps.shape
    k = part_centers.shape[0]
    hw = h * w
    xb = featmaps.reshape(bs, ch, hw).astype(jnp.bfloat16).astype(jnp.float32)
    c = part_centers.astype(jnp.float32)
    cb = c.astype(jnp.bfloat16).astype(jnp.float32)
    beta = jax.nn.sigmoid(part_smooth_factors.astype(jnp.float32))
    cx = jnp.einsum('kc,bcn->bkn', cb, xb,
                    precision=jax.lax.Precision.HIGHEST)                # (bs, k, hw)
    x_sq = jnp.sum(xb * xb, axis=1, keepdims=True)                      # (bs, 1, hw)
    c_sq = jnp.sum(c * c, axis=1)[None, :, None]                        # (1, k, 1)
    logits = jnp.minimum(2.0 * cx - x_sq - c_sq, 0.0) / beta[None, :, None]
    assign = jax.nn.softmax(logits, axis=1)                             # (bs, k, hw)
    assign_b = assign.astype(jnp.bfloat16).astype(jnp.float32)
    qx = jnp.einsum('bkn,bcn->bkc', assign_b, xb,
                    precision=jax.lax.Precision.HIGHEST)                # (bs, k, ch)
    sum_ass = jnp.maximum(jnp.sum(assign_b, axis=2, keepdims=True), 1e-5)
    sigma = jnp.sqrt(beta / 2.0)
    out = (qx / sum_ass - c[None]) / sigma[None, :, None]
    norm = jnp.sqrt(jnp.sum(out * out, axis=2, keepdims=True))
    out = out / jnp.maximum(norm, 1e-12)
    return jnp.transpose(out, (0, 2, 1)), assign.reshape(bs, k, h, w)


if __name__ == "__main__":
    base_key = jax.random.PRNGKey(0)

    def make_inputs(key, bs, k, ch, h, w):
        k_feat, k_cent, k_sf = jax.random.split(key, 3)
        featmaps = jax.random.normal(k_feat, (bs, ch, h, w), dtype=jnp.float32)
        # Deterministic init mimicking init_parameters(): kaiming-normal
        # centers clamped to min 1e-5, small random smooth factors.
        part_centers = jnp.maximum(
            jax.random.normal(k_cent, (k, ch), dtype=jnp.float32)
            * jnp.sqrt(2.0 / ch),
            1e-5,
        )
        part_smooth = 0.1 * jax.random.normal(k_sf, (k,), dtype=jnp.float32)
        return featmaps, part_centers, part_smooth

    # Small configs exercising: ragged single tile, exact multi-tile, and
    # ragged multi-tile (last-tile OOB sanitization + mask) paths.
    configs = [
        # (bs, parts, ch, h, w, max_tile)
        (2, 3, 32, 8, 8, None),    # hw=64  -> one 128-wide tile, ragged tail
        (2, 3, 32, 16, 16, 128),   # hw=256 -> two tiles, no ragged tail
        (1, 4, 64, 10, 20, 128),   # hw=200 -> two tiles, ragged last tile
    ]
    for i, (bs, k, ch, h, w, mt) in enumerate(configs):
        feats, cent, sf = make_inputs(jax.random.fold_in(base_key, i), bs, k, ch, h, w)
        outputs, assign = part_group_net(feats, cent, sf, max_tile=mt)
        outputs, assign = jax.block_until_ready((outputs, assign))

        out_ref, assign_ref = part_group_net_ref(feats, cent, sf)
        assert outputs.shape == (bs, ch, k), f"cfg {i}: bad outputs shape"
        assert assign.shape == (bs, k, h, w), f"cfg {i}: bad assign shape"
        # Tolerance reflects the deliberate bf16 MXU policy (mirrored in the
        # reference) plus the approximate EUP reciprocal in the softmax.
        assert jnp.allclose(outputs, out_ref, rtol=2e-3, atol=2e-3), \
            f"cfg {i}: outputs mismatch"
        assert jnp.allclose(assign, assign_ref, rtol=2e-3, atol=2e-3), \
            f"cfg {i}: assign mismatch"

    print("KERNEL_OK")
</pallas_src>

<mosaic_0001>
module attributes {stable_mosaic.version = 11 : i64} {
  func.func @part_group_kernel(%arg0: i32, %arg1: i32, %arg2: memref<1x32x128xf32, #tpu.memory_space<vmem>>, %arg3: memref<3x32xbf16, #tpu.memory_space<vmem>>, %arg4: memref<32x3xf32, #tpu.memory_space<vmem>>, %arg5: memref<3x1xf32, #tpu.memory_space<vmem>>, %arg6: memref<3x1xf32, #tpu.memory_space<vmem>>, %arg7: memref<1x3xf32, #tpu.memory_space<vmem>>, %arg8: memref<1x32x3xf32, #tpu.memory_space<vmem>>, %arg9: memref<1x3x128xf32, #tpu.memory_space<vmem>>, %arg10: memref<32x3xf32, #tpu.memory_space<vmem>>, %arg11: memref<1x3xf32, #tpu.memory_space<vmem>>) attributes {dimension_semantics = [#tpu.dimension_semantics<parallel>, #tpu.dimension_semantics<arbitrary>], iteration_bounds = array<i64: 2, 1>, scalar_prefetch = 0 : i64, scratch_operands = 2 : i64, tpu.core_type = #tpu.core_type<tc>, window_params = [{transform_indices = @transform_0, window_bounds = array<i64: 1, 32, 128>}, {pipeline_mode = #tpu.pipeline_mode<synchronous>, transform_indices = @transform_1, window_bounds = array<i64: 3, 32>}, {pipeline_mode = #tpu.pipeline_mode<synchronous>, transform_indices = @transform_2, window_bounds = array<i64: 32, 3>}, {pipeline_mode = #tpu.pipeline_mode<synchronous>, transform_indices = @transform_3, window_bounds = array<i64: 3, 1>}, {pipeline_mode = #tpu.pipeline_mode<synchronous>, transform_indices = @transform_4, window_bounds = array<i64: 3, 1>}, {pipeline_mode = #tpu.pipeline_mode<synchronous>, transform_indices = @transform_5, window_bounds = array<i64: 1, 3>}, {transform_indices = @transform_6, window_bounds = array<i64: 1, 32, 3>}, {transform_indices = @transform_7, window_bounds = array<i64: 1, 3, 128>}]} {
    %c0_i32 = arith.constant 0 : i32
    %0 = arith.cmpi eq, %arg1, %c0_i32 : i32
    %1 = arith.extui %0 : i1 to i32
    %c0_i32_0 = arith.constant 0 : i32
    %2 = arith.cmpi ne, %1, %c0_i32_0 : i32
    scf.if %2 {
      %cst_30 = arith.constant 0.000000e+00 : f32
      %63 = vector.broadcast %cst_30 : f32 to vector<32x3xf32>
      %c0_31 = arith.constant 0 : index
      %c0_32 = arith.constant 0 : index
      %64 = vector.load %arg10[%c0_31, %c0_32] : memref<32x3xf32, #tpu.memory_space<vmem>>, vector<32x3xf32>
      tpu.vector_store %arg10[%c0_31, %c0_32], %63 {strides = array<i32>} : memref<32x3xf32, #tpu.memory_space<vmem>>, vector<32x3xf32>,
      %cst_33 = arith.constant 0.000000e+00 : f32
      %65 = vector.broadcast %cst_33 : f32 to vector<1x3xf32>
      %c0_34 = arith.constant 0 : index
      %c0_35 = arith.constant 0 : index
      %66 = vector.load %arg11[%c0_34, %c0_35] : memref<1x3xf32, #tpu.memory_space<vmem>>, vector<1x3xf32>
      tpu.vector_store %arg11[%c0_34, %c0_35], %65 {strides = array<i32>} : memref<1x3xf32, #tpu.memory_space<vmem>>, vector<1x3xf32>,
    } else {
    }
    %c0 = arith.constant 0 : index
    %c0_1 = arith.constant 0 : index
    %c0_2 = arith.constant 0 : index
    %3 = vector.load %arg2[%c0, %c0_1, %c0_2] : memref<1x32x128xf32, #tpu.memory_space<vmem>>, vector<1x32x128xf32>
    %4 = vector.shape_cast %3 : vector<1x32x128xf32> to vector<32x128xf32>
    %5 = arith.truncf %4 : vector<32x128xf32> to vector<32x128xbf16>
    %6 = tpu.iota {dimensions = array<i32: 1>} : vector<1x128xi32>
    %c128_i32 = arith.constant 128 : i32
    %7 = arith.muli %arg1, %c128_i32 : i32
    %8 = vector.broadcast %7 : i32 to vector<1x128xi32>
    %9 = arith.addi %6, %8 : vector<1x128xi32>
    %c64_i32 = arith.constant 64 : i32
    %10 = vector.broadcast %c64_i32 : i32 to vector<1x128xi32>
    %11 = arith.cmpi slt, %9, %10 : vector<1x128xi32>
    %cst = arith.constant 0.000000e+00 : f32
    %12 = arith.truncf %cst : f32 to bf16
    %13 = vector.shape_cast %11 : vector<1x128xi1> to vector<1x128xi1>
    %14 = vector.broadcast %13 : vector<1x128xi1> to vector<32x128xi1>
    %15 = vector.broadcast %12 : bf16 to vector<32x128xbf16>
    %16 = arith.select %14, %5, %15 : vector<32x128xi1>, vector<32x128xbf16>
    %17 = arith.extui %11 : vector<1x128xi1> to vector<1x128xi32>
    %18 = arith.sitofp %17 : vector<1x128xi32> to vector<1x128xf32>
    %19 = arith.truncf %18 : vector<1x128xf32> to vector<1x128xbf16>
    %c0_3 = arith.constant 0 : index
    %c0_4 = arith.constant 0 : index
    %20 = vector.load %arg3[%c0_3, %c0_4] : memref<3x32xbf16, #tpu.memory_space<vmem>>, vector<3x32xbf16>
    %cst_5 = arith.constant dense<0.000000e+00> : vector<3x128xf32>
    %21 = tpu.matmul %20, %16, %cst_5 {dimension_numbers = #tpu.dot_dimension_numbers<[1], [0], [0], [1], [0, 0, 1, 1], [], []>} : vector<3x32xbf16>, vector<32x128xbf16>, vector<3x128xf32> -> vector<3x128xf32>
    %22 = arith.extf %16 : vector<32x128xbf16> to vector<32x128xf32>
    %23 = arith.mulf %22, %22 : vector<32x128xf32>
    %cst_6 = arith.constant dense<0.000000e+00> : vector<128xf32>
    %24 = vector.multi_reduction <add>, %23, %cst_6 [0] : vector<32x128xf32> to vector<128xf32>
    %25 = vector.shape_cast %24 : vector<128xf32> to vector<1x128xf32>
    %cst_7 = arith.constant 2.000000e+00 : f32
    %26 = vector.broadcast %cst_7 : f32 to vector<3x128xf32>
    %27 = arith.mulf %26, %21 : vector<3x128xf32>
    %28 = vector.broadcast %25 : vector<1x128xf32> to vector<3x128xf32>
    %29 = arith.subf %27, %28 : vector<3x128xf32>
    %c0_8 = arith.constant 0 : index
    %c0_9 = arith.constant 0 : index
    %30 = vector.load %arg5[%c0_8, %c0_9] : memref<3x1xf32, #tpu.memory_space<vmem>>, vector<3x1xf32>
    %31 = vector.broadcast %30 : vector<3x1xf32> to vector<3x128xf32>
    %32 = arith.subf %29, %31 : vector<3x128xf32>
    %cst_10 = arith.constant 0.000000e+00 : f32
    %33 = vector.broadcast %cst_10 : f32 to vector<3x128xf32>
    %34 = arith.minimumf %32, %33 : vector<3x128xf32>
    %c0_11 = arith.constant 0 : index
    %c0_12 = arith.constant 0 : index
    %35 = vector.load %arg6[%c0_11, %c0_12] : memref<3x1xf32, #tpu.memory_space<vmem>>, vector<3x1xf32>
    %36 = vector.broadcast %35 : vector<3x1xf32> to vector<3x128xf32>
    %37 = arith.mulf %34, %36 : vector<3x128xf32>
    %cst_13 = arith.constant dense<0xFF800000> : vector<128xf32>
    %38 = vector.multi_reduction <maximumf>, %37, %cst_13 [0] : vector<3x128xf32> to vector<128xf32>
    %39 = vector.shape_cast %38 : vector<128xf32> to vector<1x128xf32>
    %40 = vector.broadcast %39 : vector<1x128xf32> to vector<3x128xf32>
    %41 = arith.subf %37, %40 : vector<3x128xf32>
    %42 = math.exp %41 : vector<3x128xf32>
    %cst_14 = arith.constant dense<0.000000e+00> : vector<128xf32>
    %43 = vector.multi_reduction <add>, %42, %cst_14 [0] : vector<3x128xf32> to vector<128xf32>
    %44 = vector.shape_cast %43 : vector<128xf32> to vector<1x128xf32>
    %45 = tpu.reciprocal %44 {approx = true} : vector<1x128xf32> -> vector<1x128xf32>
    %46 = vector.broadcast %45 : vector<1x128xf32> to vector<3x128xf32>
    %47 = arith.mulf %42, %46 : vector<3x128xf32>
    %c0_15 = arith.constant 0 : index
    %c0_16 = arith.constant 0 : index
    %c0_17 = arith.constant 0 : index
    %48 = vector.load %arg9[%c0_15, %c0_16, %c0_17] : memref<1x3x128xf32, #tpu.memory_space<vmem>>, vector<1x3x128xf32>
    %49 = vector.shape_cast %48 : vector<1x3x128xf32> to vector<3x128xf32>
    %50 = vector.shape_cast %47 : vector<3x128xf32> to vector<1x3x128xf32>
    tpu.vector_store %arg9[%c0_15, %c0_16, %c0_17], %50 {strides = array<i32>} : memref<1x3x128xf32, #tpu.memory_space<vmem>>, vector<1x3x128xf32>,
    %51 = arith.truncf %47 : vector<3x128xf32> to vector<3x128xbf16>
    %c0_18 = arith.constant 0 : index
    %c0_19 = arith.constant 0 : index
    %52 = vector.load %arg10[%c0_18, %c0_19] : memref<32x3xf32, #tpu.memory_space<vmem>>, vector<32x3xf32>
    %cst_20 = arith.constant dense<0.000000e+00> : vector<32x3xf32>
    %53 = tpu.matmul %16, %51, %cst_20 {dimension_numbers = #tpu.dot_dimension_numbers<[1], [1], [0], [0], [0, 0, 1, 0], [], []>} : vector<32x128xbf16>, vector<3x128xbf16>, vector<32x3xf32> -> vector<32x3xf32>
    %54 = arith.addf %52, %53 : vector<32x3xf32>
    %c0_21 = arith.constant 0 : index
    %c0_22 = arith.constant 0 : index
    %55 = vector.load %arg10[%c0_21, %c0_22] : memref<32x3xf32, #tpu.memory_space<vmem>>, vector<32x3xf32>
    tpu.vector_store %arg10[%c0_21, %c0_22], %54 {strides = array<i32>} : memref<32x3xf32, #tpu.memory_space<vmem>>, vector<32x3xf32>,
    %c0_23 = arith.constant 0 : index
    %c0_24 = arith.constant 0 : index
    %56 = vector.load %arg11[%c0_23, %c0_24] : memref<1x3xf32, #tpu.memory_space<vmem>>, vector<1x3xf32>
    %cst_25 = arith.constant dense<0.000000e+00> : vector<1x3xf32>
    %57 = tpu.matmul %19, %51, %cst_25 {dimension_numbers = #tpu.dot_dimension_numbers<[1], [1], [0], [0], [0, 0, 1, 0], [], []>} : vector<1x128xbf16>, vector<3x128xbf16>, vector<1x3xf32> -> vector<1x3xf32>
    %58 = arith.addf %56, %57 : vector<1x3xf32>
    %c0_26 = arith.constant 0 : index
    %c0_27 = arith.constant 0 : index
    %59 = vector.load %arg11[%c0_26, %c0_27] : memref<1x3xf32, #tpu.memory_space<vmem>>, vector<1x3xf32>
    tpu.vector_store %arg11[%c0_26, %c0_27], %58 {strides = array<i32>} : memref<1x3xf32, #tpu.memory_space<vmem>>, vector<1x3xf32>,
    %c0_i32_28 = arith.constant 0 : i32
    %60 = arith.cmpi eq, %arg1, %c0_i32_28 : i32
    %61 = arith.extui %60 : i1 to i32
    %c0_i32_29 = arith.constant 0 : i32
    %62 = arith.cmpi ne, %61, %c0_i32_29 : i32
    scf.if %62 {
      %c0_30 = arith.constant 0 : index
      %c0_31 = arith.constant 0 : index
      %63 = vector.load %arg11[%c0_30, %c0_31] : memref<1x3xf32, #tpu.memory_space<vmem>>, vector<1x3xf32>
      %cst_32 = arith.constant 9.99999974E-6 : f32
      %64 = vector.broadcast %cst_32 : f32 to vector<1x3xf32>
      %65 = arith.maximumf %63, %64 : vector<1x3xf32>
      %cst_33 = arith.constant 1.000000e+00 : f32
      %66 = vector.broadcast %cst_33 : f32 to vector<1x3xf32>
      %67 = arith.divf %66, %65 : vector<1x3xf32>
      %c0_34 = arith.constant 0 : index
      %c0_35 = arith.constant 0 : index
      %68 = vector.load %arg10[%c0_34, %c0_35] : memref<32x3xf32, #tpu.memory_space<vmem>>, vector<32x3xf32>
      %c0_36 = arith.constant 0 : index
      %c0_37 = arith.constant 0 : index
      %69 = vector.load %arg7[%c0_36, %c0_37] : memref<1x3xf32, #tpu.memory_space<vmem>>, vector<1x3xf32>
      %70 = arith.mulf %67, %69 : vector<1x3xf32>
      %71 = vector.broadcast %70 : vector<1x3xf32> to vector<32x3xf32>
      %72 = arith.mulf %68, %71 : vector<32x3xf32>
      %c0_38 = arith.constant 0 : index
      %c0_39 = arith.constant 0 : index
      %73 = vector.load %arg4[%c0_38, %c0_39] : memref<32x3xf32, #tpu.memory_space<vmem>>, vector<32x3xf32>
      %74 = arith.subf %72, %73 : vector<32x3xf32>
      %75 = arith.mulf %74, %74 : vector<32x3xf32>
      %cst_40 = arith.constant dense<0.000000e+00> : vector<3xf32>
      %76 = vector.multi_reduction <add>, %75, %cst_40 [0] : vector<32x3xf32> to vector<3xf32>
      %77 = vector.shape_cast %76 : vector<3xf32> to vector<1x3xf32>
      %cst_41 = arith.constant 1.000000e-24 : f32
      %78 = vector.broadcast %cst_41 : f32 to vector<1x3xf32>
      %79 = arith.maximumf %77, %78 : vector<1x3xf32>
      %80 = math.rsqrt %79 : vector<1x3xf32>
      %81 = vector.broadcast %80 : vector<1x3xf32> to vector<32x3xf32>
      %82 = arith.mulf %74, %81 : vector<32x3xf32>
      %c0_42 = arith.constant 0 : index
      %c0_43 = arith.constant 0 : index
      %c0_44 = arith.constant 0 : index
      %83 = vector.load %arg8[%c0_42, %c0_43, %c0_44] : memref<1x32x3xf32, #tpu.memory_space<vmem>>, vector<1x32x3xf32>
      %84 = vector.shape_cast %83 : vector<1x32x3xf32> to vector<32x3xf32>
      %85 = vector.shape_cast %82 : vector<32x3xf32> to vector<1x32x3xf32>
      tpu.vector_store %arg8[%c0_42, %c0_43, %c0_44], %85 {strides = array<i32>} : memref<1x32x3xf32, #tpu.memory_space<vmem>>, vector<1x32x3xf32>,
    } else {
    }
    return
  }
  func.func @transform_0(%arg0: i32, %arg1: i32) -> (i32, i32, i32) {
    %c0_i32 = arith.constant 0 : i32
    %c0_i32_0 = arith.constant 0 : i32
    return %arg0, %c0_i32, %arg1 : i32, i32, i32
  }
  func.func @transform_1(%arg0: i32, %arg1: i32) -> (i32, i32) {
    %c0_i32 = arith.constant 0 : i32
    %c0_i32_0 = arith.constant 0 : i32
    %c0_i32_1 = arith.constant 0 : i32
    return %c0_i32, %c0_i32_0 : i32, i32
  }
  func.func @transform_2(%arg0: i32, %arg1: i32) -> (i32, i32) {
    %c0_i32 = arith.constant 0 : i32
    %c0_i32_0 = arith.constant 0 : i32
    %c0_i32_1 = arith.constant 0 : i32
    return %c0_i32, %c0_i32_0 : i32, i32
  }
  func.func @transform_3(%arg0: i32, %arg1: i32) -> (i32, i32) {
    %c0_i32 = arith.constant 0 : i32
    %c0_i32_0 = arith.constant 0 : i32
    %c0_i32_1 = arith.constant 0 : i32
    return %c0_i32, %c0_i32_0 : i32, i32
  }
  func.func @transform_4(%arg0: i32, %arg1: i32) -> (i32, i32) {
    %c0_i32 = arith.constant 0 : i32
    %c0_i32_0 = arith.constant 0 : i32
    %c0_i32_1 = arith.constant 0 : i32
    return %c0_i32, %c0_i32_0 : i32, i32
  }
  func.func @transform_5(%arg0: i32, %arg1: i32) -> (i32, i32) {
    %c0_i32 = arith.constant 0 : i32
    %c0_i32_0 = arith.constant 0 : i32
    %c0_i32_1 = arith.constant 0 : i32
    return %c0_i32, %c0_i32_0 : i32, i32
  }
  func.func @transform_6(%arg0: i32, %arg1: i32) -> (i32, i32, i32) {
    %c0_i32 = arith.constant 0 : i32
    %c0_i32_0 = arith.constant 0 : i32
    %c0_i32_1 = arith.constant 0 : i32
    return %arg0, %c0_i32, %c0_i32_0 : i32, i32, i32
  }
  func.func @transform_7(%arg0: i32, %arg1: i32) -> (i32, i32, i32) {
    %c0_i32 = arith.constant 0 : i32
    %c0_i32_0 = arith.constant 0 : i32
    return %arg0, %c0_i32, %arg1 : i32, i32, i32
  }
}

</mosaic_0001>

<llo_original>
// kernel: tpu_custom_call.1
$region0: #{tpu_custom_call.1}
  #allocation0 [shape = 'u32[]', space=smem, size = 0x4, offset = 0x4, fixed_abs, tag = 'smem constant byte address 0x4 - core index']
  #allocation1 [shape = 'u32[144,128]{1,0:T(1,128)}', space=vmem, size = 0x12000, scoped, tag = 'internal scratch']
  #allocation2 [shape = 'f32[32,3]{1,0:T(8,128)}', space=vmem, size = 0x4000, scoped, tag = 'scratch operand']
  #allocation3 [shape = 'f32[1,3]{1,0:T(1,128)}', space=vmem, size = 0x200, scoped, tag = 'scratch operand']
  %s0 = inlined_call_operand.hbm [shape: f32[2,32,64], index: 0, kind: input, shape index: {}]
  %s1 = inlined_call_operand.vmem [shape: bf16[3,32], index: 1, kind: input, shape index: {}]
  %s2 = inlined_call_operand.vmem [shape: f32[32,3], index: 2, kind: input, shape index: {}]
  %s3 = inlined_call_operand.vmem [shape: f32[3,1], index: 3, kind: input, shape index: {}]
  %s4 = inlined_call_operand.vmem [shape: f32[3,1], index: 4, kind: input, shape index: {}]
  %s5 = inlined_call_operand.vmem [shape: f32[1,3], index: 5, kind: input, shape index: {}]
  %s6 = inlined_call_operand.vmem [shape: f32[2,32,3], index: 6, kind: output, shape index: {0}]
  %s7 = inlined_call_operand.vmem [shape: f32[2,3,64], index: 7, kind: output, shape index: {1}]
  %8 = xla_tuple %s6, %s7
  %s9 = sld [smem:[#allocation0]]
  $region77: #{tpu_custom_call.1} parent=0
    _
  %s11 = ssub.s32 1, %s9
  %s12 = scalar_select 0, %s11, %s9
  $region1: #{tpu_custom_call.1} parent=0
    #allocation4 [shape = 'u8[32768]{0}', space=vmem, size = 0x8000, scoped, tag = 'input window, operand 0']
    #allocation5 [shape = 's32[2]{0}', space=sflag, size = 0x8, scoped, tag = 'scoped memory for tpu_custom_call.1']
    %13 = vsyncpa [#allocation5], 0
    %s14 = scalar_lea.sflag [#allocation5], 1
    %15 = vsyncpa %s14, 0
    loop: start=0, step=1, limit=4
    $region2: #{tpu_custom_call.1} parent=1 // loop_pre_header
      _
    $region3: #{tpu_custom_call.1} parent=1 // loop_header
      %s17 = sphi 0, %s21
      %p18 = scmp.ge.s32.totalorder %s17, 4
      %s24 = sphi 0, %s36
      %s25 = sphi 0, %s32
      %s26 = sphi 0, %s24
      %s27 = sphi 0, %s25
      %s28 = sphi 0, %s26
      %s29 = sphi 0, %s27
      %s41 = sphi 0, %s43
      %s44 = sphi 0, %s41
      %s45 = sphi 0, %s44
      %s61 = sphi 0, %s45
      %s65 = sphi 0, %s65
      %s67 = sphi 0, %s65
      %s68 = sphi 0, %s67
      %s82 = sphi 0, %s68
      %s86 = sphi 0, %s86
      %s88 = sphi 0, %s86
      %s89 = sphi 0, %s88
      %s103 = sphi 0, %s89
      %s107 = sphi 0, %s107
      %s109 = sphi 0, %s107
      %s110 = sphi 0, %s109
      %s124 = sphi 0, %s110
      %s128 = sphi 0, %s128
      %s130 = sphi 0, %s128
      %s131 = sphi 0, %s130
      %s145 = sphi 0, %s131
      %s149 = sphi 0, %s149
      %s151 = sphi 0, %s149
      %s152 = sphi 0, %s151
      %s166 = sphi 0, %s152
      %s172 = sphi 0, %s174
      %s175 = sphi 0, %s172
      %s176 = sphi 0, %s175
      %s192 = sphi 0, %s176
      %s200 = sphi 0, %s202
      %s203 = sphi 0, %s200
      %s204 = sphi 0, %s203
      %s220 = sphi 0, %s204
    $region4: #{tpu_custom_call.1} parent=1 // loop_header_branch
      %20 = sbr.rel (%p18) target = $region8
    $region5: #{tpu_custom_call.1} parent=1 // loop_body
      %s22 = ssub.s32 %s17, 1
      %s23 = ssub.s32 %s17, 2
      %s30 = sadd.s32 1, %s25
      %p31 = scmp.ge.s32.totalorder %s30, 1
      %s32 = scalar_select %p31, 0, %s30
      %s33 = sadd.s32 1, %s24
      %s34 = scalar_select %p31, %s33, %s24
      %p35 = scmp.ge.s32.totalorder %s34, 2
      %s36 = scalar_select %p35, 0, %s34
      %s37 = ssub.s32 %s24, %s36
      %s38 = ssub.s32 %s25, %s32
      %s39 = sor.u32 %s37, %s38
      %p40 = scmp.eq.s32.totalorder %s39, 0
      %s42 = sadd.s32 %s41, 1
      %s43 = scalar_select %p40, %s41, %s42
      %p46 = pneg %p40
      %p47 = scmp.eq.s32.totalorder %s17, 1
      %p48 = por %p46, %p47
      %p49 = scmp.ne.s32.totalorder %s41, %s44
      %p50 = scmp.eq.s32.totalorder %s17, 0
      %p51 = por %p49, %p50
      %p52 = scmp.ne.s32.totalorder %s41, %s44
      %p53 = scmp.eq.s32.totalorder %s22, 1
      %p54 = por %p52, %p53
      %p55 = scmp.ne.s32.totalorder %s44, %s45
      %p56 = scmp.eq.s32.totalorder %s22, 0
      %p57 = por %p55, %p56
      %p58 = scmp.ne.s32.totalorder %s44, %s45
      %p59 = scmp.eq.s32.totalorder %s23, 1
      %p60 = por %p58, %p59
      %p62 = scmp.ne.s32.totalorder %s45, %s61
      %p63 = scmp.eq.s32.totalorder %s23, 0
      %p64 = por %p62, %p63
      %s66 = sadd.s32 %s65, 1
      %p69 = scmp.eq.s32.totalorder %s17, 1
      %p70 = scmp.ne.s32.totalorder %s65, %s67
      %p71 = scmp.eq.s32.totalorder %s17, 0
      %p72 = por %p70, %p71
      %p73 = scmp.ne.s32.totalorder %s65, %s67
      %p74 = scmp.eq.s32.totalorder %s22, 1
      %p75 = por %p73, %p74
      %p76 = scmp.ne.s32.totalorder %s67, %s68
      %p77 = scmp.eq.s32.totalorder %s22, 0
      %p78 = por %p76, %p77
      %p79 = scmp.ne.s32.totalorder %s67, %s68
      %p80 = scmp.eq.s32.totalorder %s23, 1
      %p81 = por %p79, %p80
      %p83 = scmp.ne.s32.totalorder %s68, %s82
      %p84 = scmp.eq.s32.totalorder %s23, 0
      %p85 = por %p83, %p84
      %s87 = sadd.s32 %s86, 1
      %p90 = scmp.eq.s32.totalorder %s17, 1
      %p91 = scmp.ne.s32.totalorder %s86, %s88
      %p92 = scmp.eq.s32.totalorder %s17, 0
      %p93 = por %p91, %p92
      %p94 = scmp.ne.s32.totalorder %s86, %s88
      %p95 = scmp.eq.s32.totalorder %s22, 1
      %p96 = por %p94, %p95
      %p97 = scmp.ne.s32.totalorder %s88, %s89
      %p98 = scmp.eq.s32.totalorder %s22, 0
      %p99 = por %p97, %p98
      %p100 = scmp.ne.s32.totalorder %s88, %s89
      %p101 = scmp.eq.s32.totalorder %s23, 1
      %p102 = por %p100, %p101
      %p104 = scmp.ne.s32.totalorder %s89, %s103
      %p105 = scmp.eq.s32.totalorder %s23, 0
      %p106 = por %p104, %p105
      %s108 = sadd.s32 %s107, 1
      %p111 = scmp.eq.s32.totalorder %s17, 1
      %p112 = scmp.ne.s32.totalorder %s107, %s109
      %p113 = scmp.eq.s32.totalorder %s17, 0
      %p114 = por %p112, %p113
      %p115 = scmp.ne.s32.totalorder %s107, %s109
      %p116 = scmp.eq.s32.totalorder %s22, 1
      %p117 = por %p115, %p116
      %p118 = scmp.ne.s32.totalorder %s109, %s110
      %p119 = scmp.eq.s32.totalorder %s22, 0
      %p120 = por %p118, %p119
      %p121 = scmp.ne.s32.totalorder %s109, %s110
      %p122 = scmp.eq.s32.totalorder %s23, 1
      %p123 = por %p121, %p122
      %p125 = scmp.ne.s32.totalorder %s110, %s124
      %p126 = scmp.eq.s32.totalorder %s23, 0
      %p127 = por %p125, %p126
      %s129 = sadd.s32 %s128, 1
      %p132 = scmp.eq.s32.totalorder %s17, 1
      %p133 = scmp.ne.s32.totalorder %s128, %s130
      %p134 = scmp.eq.s32.totalorder %s17, 0
      %p135 = por %p133, %p134
      %p136 = scmp.ne.s32.totalorder %s128, %s130
      %p137 = scmp.eq.s32.totalorder %s22, 1
      %p138 = por %p136, %p137
      %p139 = scmp.ne.s32.totalorder %s130, %s131
      %p140 = scmp.eq.s32.totalorder %s22, 0
      %p141 = por %p139, %p140
      %p142 = scmp.ne.s32.totalorder %s130, %s131
      %p143 = scmp.eq.s32.totalorder %s23, 1
      %p144 = por %p142, %p143
      %p146 = scmp.ne.s32.totalorder %s131, %s145
      %p147 = scmp.eq.s32.totalorder %s23, 0
      %p148 = por %p146, %p147
      %s150 = sadd.s32 %s149, 1
      %p153 = scmp.eq.s32.totalorder %s17, 1
      %p154 = scmp.ne.s32.totalorder %s149, %s151
      %p155 = scmp.eq.s32.totalorder %s17, 0
      %p156 = por %p154, %p155
      %p157 = scmp.ne.s32.totalorder %s149, %s151
      %p158 = scmp.eq.s32.totalorder %s22, 1
      %p159 = por %p157, %p158
      %p160 = scmp.ne.s32.totalorder %s151, %s152
      %p161 = scmp.eq.s32.totalorder %s22, 0
      %p162 = por %p160, %p161
      %p163 = scmp.ne.s32.totalorder %s151, %s152
      %p164 = scmp.eq.s32.totalorder %s23, 1
      %p165 = por %p163, %p164
      %p167 = scmp.ne.s32.totalorder %s152, %s166
      %p168 = scmp.eq.s32.totalorder %s23, 0
      %p169 = por %p167, %p168
      %s170 = ssub.s32 %s24, %s36
      %p171 = scmp.eq.s32.totalorder %s170, 0
      %s173 = sadd.s32 %s172, 1
      %s174 = scalar_select %p171, %s172, %s173
      %p177 = pneg %p171
      %p178 = scmp.eq.s32.totalorder %s17, 1
      %p179 = por %p177, %p178
      %p180 = scmp.ne.s32.totalorder %s172, %s175
      %p181 = scmp.eq.s32.totalorder %s17, 0
      %p182 = por %p180, %p181
      %p183 = scmp.ne.s32.totalorder %s172, %s175
      %p184 = scmp.eq.s32.totalorder %s22, 1
      %p185 = por %p183, %p184
      %p186 = scmp.ne.s32.totalorder %s175, %s176
      %p187 = scmp.eq.s32.totalorder %s22, 0
      %p188 = por %p186, %p187
      %p189 = scmp.ne.s32.totalorder %s175, %s176
      %p190 = scmp.eq.s32.totalorder %s23, 1
      %p191 = por %p189, %p190
      %p193 = scmp.ne.s32.totalorder %s176, %s192
      %p194 = scmp.eq.s32.totalorder %s23, 0
      %p195 = por %p193, %p194
      %s196 = ssub.s32 %s24, %s36
      %s197 = ssub.s32 %s25, %s32
      %s198 = sor.u32 %s196, %s197
      %p199 = scmp.eq.s32.totalorder %s198, 0
      %s201 = sadd.s32 %s200, 1
      %s202 = scalar_select %p199, %s200, %s201
      %p205 = pneg %p199
      %p206 = scmp.eq.s32.totalorder %s17, 1
      %p207 = por %p205, %p206
      %p208 = scmp.ne.s32.totalorder %s200, %s203
      %p209 = scmp.eq.s32.totalorder %s17, 0
      %p210 = por %p208, %p209
      %p211 = scmp.ne.s32.totalorder %s200, %s203
      %p212 = scmp.eq.s32.totalorder %s22, 1
      %p213 = por %p211, %p212
      %p214 = scmp.ne.s32.totalorder %s203, %s204
      %p215 = scmp.eq.s32.totalorder %s22, 0
      %p216 = por %p214, %p215
      %p217 = scmp.ne.s32.totalorder %s203, %s204
      %p218 = scmp.eq.s32.totalorder %s23, 1
      %p219 = por %p217, %p218
      %p221 = scmp.ne.s32.totalorder %s204, %s220
      %p222 = scmp.eq.s32.totalorder %s23, 0
      %p223 = por %p221, %p222
      %p224 = scmp.le.s32.totalorder 1, %s17
      %p225 = scmp.lt.s32.totalorder %s17, 3
      %p226 = pnand %p224, %p225
      %p227 = pneg %p226
      // Predicated region
      $region9: #{tpu_custom_call.1} parent=5 // pred_check
        _
      $region10: #{tpu_custom_call.1} parent=5 // pred_check_branch
        %229 = sbr.rel (%p226) target = $region12
      $region11: #{tpu_custom_call.1} parent=5 // pred_region
        %s230 = ssub.s32 %s17, 1
        // Predicated region
        $region13: #{tpu_custom_call.1} parent=11 // pred_check
          %p231 = pneg %p78
        $region14: #{tpu_custom_call.1} parent=11 // pred_check_branch
          %233 = sbr.rel (%p231) target = $region16
        $region15: #{tpu_custom_call.1} parent=11 // pred_region
          _
        $region16: #{tpu_custom_call.1} parent=11 // pred_fallthru
          _
        // Predicated region
        $region17: #{tpu_custom_call.1} parent=11 // pred_check
          %p234 = pneg %p99
        $region18: #{tpu_custom_call.1} parent=11 // pred_check_branch
          %236 = sbr.rel (%p234) target = $region20
        $region19: #{tpu_custom_call.1} parent=11 // pred_region
          _
        $region20: #{tpu_custom_call.1} parent=11 // pred_fallthru
          _
        // Predicated region
        $region21: #{tpu_custom_call.1} parent=11 // pred_check
          %p237 = pneg %p120
        $region22: #{tpu_custom_call.1} parent=11 // pred_check_branch
          %239 = sbr.rel (%p237) target = $region24
        $region23: #{tpu_custom_call.1} parent=11 // pred_region
          _
        $region24: #{tpu_custom_call.1} parent=11 // pred_fallthru
          _
        // Predicated region
        $region25: #{tpu_custom_call.1} parent=11 // pred_check
          %p240 = pneg %p141
        $region26: #{tpu_custom_call.1} parent=11 // pred_check_branch
          %242 = sbr.rel (%p240) target = $region28
        $region27: #{tpu_custom_call.1} parent=11 // pred_region
          _
        $region28: #{tpu_custom_call.1} parent=11 // pred_fallthru
          _
        // Predicated region
        $region29: #{tpu_custom_call.1} parent=11 // pred_check
          %p243 = pneg %p162
        $region30: #{tpu_custom_call.1} parent=11 // pred_check_branch
          %245 = sbr.rel (%p243) target = $region32
        $region31: #{tpu_custom_call.1} parent=11 // pred_region
          _
        $region32: #{tpu_custom_call.1} parent=11 // pred_fallthru
          _
      $region12: #{tpu_custom_call.1} parent=5 // pred_fallthru
        _
      %p246 = scmp.lt.s32.totalorder %s17, 2
      // Predicated region
      $region33: #{tpu_custom_call.1} parent=5 // pred_check
        %p247 = pneg %p246
      $region34: #{tpu_custom_call.1} parent=5 // pred_check_branch
        %249 = sbr.rel (%p247) target = $region36
      $region35: #{tpu_custom_call.1} parent=5 // pred_region
        // Predicated region
        $region37: #{tpu_custom_call.1} parent=35 // pred_check
          %p250 = pneg %p51
        $region38: #{tpu_custom_call.1} parent=35 // pred_check_branch
          %252 = sbr.rel (%p250) target = $region40
        $region39: #{tpu_custom_call.1} parent=35 // pred_region
          %s253 = sand.u32 %s41, 1
          %s254 = scalar_lea.sflag [#allocation5], %s253
          %s255 = sand.u32 %s41, 1
          %s256 = smul.addr %s255, 32
          %s257 = scalar_lea.vmem [#allocation4], %s256
          %s259 = ssub.s32 512, 512
          %260 = vsyncadd %s254, %s259
          %s261 = smul.addr %s24, 4
          %s262 = sadd.s32 %s25, %s261
          %s263 = smul.addr %s262, 128
          %s264 = scalar_lea.hbm %s0, %s263
          %s265 = sshll.u32 %s257, 4
          %s266 = int_to_ptr.vmem [resolvable:$true] %s265
          %271 = dma.hbm_to_vmem [thread:$0]  %s264, 512, %s266, %s254, 128, 128, 8
        $region40: #{tpu_custom_call.1} parent=35 // pred_fallthru
          _
      $region36: #{tpu_custom_call.1} parent=5 // pred_fallthru
        _
      %p272 = scmp.le.s32.totalorder 1, %s17
      %p273 = scmp.lt.s32.totalorder %s17, 3
      %p274 = pnand %p272, %p273
      %p275 = pneg %p274
      // Predicated region
      $region41: #{tpu_custom_call.1} parent=5 // pred_check
        _
      $region42: #{tpu_custom_call.1} parent=5 // pred_check_branch
        %277 = sbr.rel (%p274) target = $region44
      $region43: #{tpu_custom_call.1} parent=5 // pred_region
        %s278 = ssub.s32 %s17, 1
        %s279 = sand.u32 %s44, 1
        %s280 = scalar_lea.sflag [#allocation5], %s279
        %s281 = sand.u32 %s44, 1
        %s282 = smul.addr %s281, 32
        %s283 = scalar_lea.vmem [#allocation4], %s282
        // Predicated region
        $region45: #{tpu_custom_call.1} parent=43 // pred_check
          %p284 = pneg %p57
        $region46: #{tpu_custom_call.1} parent=43 // pred_check_branch
          %286 = sbr.rel (%p284) target = $region48
        $region47: #{tpu_custom_call.1} parent=43 // pred_region
          %287 = dma.done %s280, 512
        $region48: #{tpu_custom_call.1} parent=43 // pred_fallthru
          _
        %s288 = sand.u32 %s44, 1
        %s289 = scalar_lea.sflag [#allocation5], %s288
        %s290 = sand.u32 %s44, 1
        %s291 = smul.addr %s290, 32
        %s292 = scalar_lea.vmem [#allocation4], %s291
        %p293 = pneg %p57
        %p294 = pneg %p54
        %p295 = pneg %p78
        %p296 = pneg %p75
        %p297 = pneg %p99
        %p298 = pneg %p96
        %p299 = pneg %p120
        %p300 = pneg %p117
        %p301 = pneg %p141
        %p302 = pneg %p138
        %p303 = pneg %p162
        %p304 = pneg %p159
        %p305 = pneg %p188
        %p306 = pneg %p185
        %p307 = scmp.lt.s32.totalorder %s26, 1
        %s308 = scalar_select %p307, %s26, 1
        %s309 = smul.addr %s308, 4
        %s310 = smul.addr %s309, 8
        %s311 = scalar_lea.vmem %s6, %s310
        %p312 = pneg %p216
        %p313 = pneg %p213
        %p314 = scmp.lt.s32.totalorder %s26, 1
        %s315 = scalar_select %p314, %s26, 1
        %p316 = scmp.lt.s32.totalorder %s27, 0
        %s317 = scalar_select %p316, %s27, 0
        %s318 = sadd.s32 %s317, %s315
        %s319 = smul.addr %s318, 4
        %s320 = scalar_lea.vmem %s7, %s319
        %p321 = scmp.lt.s32.totalorder %s26, 1
        %s322 = scalar_select %p321, %s26, 1
        %s323 = smul.addr %s322, 4
        %s324 = smul.addr %s323, 8
        %s325 = scalar_lea.vmem %s6, %s324
        %p326 = scmp.lt.s32.totalorder %s26, 1
        %s327 = scalar_select %p326, %s26, 1
        %p328 = scmp.lt.s32.totalorder %s27, 0
        %s329 = scalar_select %p328, %s27, 0
        %s330 = sadd.s32 %s329, %s327
        %s331 = smul.addr %s330, 4
        %s332 = scalar_lea.vmem %s7, %s331
        %p336 = scmp.eq.s32.totalorder %s27, 0
        // Predicated region
        $region49: #{tpu_custom_call.1} parent=43 // pred_check
          %p337 = pneg %p336
        $region50: #{tpu_custom_call.1} parent=43 // pred_check_branch
          %339 = sbr.rel (%p337) target = $region52
        $region51: #{tpu_custom_call.1} parent=43 // pred_region
          %vm340 = vcmask 23552
          %341 = vst.msk [vmem:[#allocation2] sm:$0xff] %vm340, 0.0
          %342 = vst.msk [vmem:[#allocation2 + $0x8] sm:$0xff] %vm340, 0.0
          %343 = vst.msk [vmem:[#allocation2 + $0x10] sm:$0xff] %vm340, 0.0
          %344 = vst.msk [vmem:[#allocation2 + $0x18] sm:$0xff] %vm340, 0.0
          %vm345 = vcmask 16384
          %346 = vst.msk [vmem:[#allocation3] sm:$0x1] %vm345, 0.0
        $region52: #{tpu_custom_call.1} parent=43 // pred_fallthru
          _
        %v347 = vld [vmem:[%s283] sm:$0xff]
        %v348 = vld [vmem:[%s283 + $0x8] sm:$0xff]
        %v349 = vld [vmem:[%s283 + $0x10] sm:$0xff]
        %v350 = vld [vmem:[%s283 + $0x18] sm:$0xff]
        %v351 = vpack.c.bf16 %v348, %v347
        %v352 = vpack.c.bf16 %v350, %v349
        %v353 = vlaneseq
        %v354 = vand.u32 %v353, 127
        %s355 = smul.u32 %s27, 128
        %v356 = vstv %s355
        %v357 = vadd.s32 %v354, %v356
        %vm358 = vcmp.lt.s32.totalorder %v357, 64
        %v359 = vsel %vm358, 1, 0
        %vm360 = vcmp.eq.s32.totalorder %v359, 1
        %vm361 = vmpackc.low %vm360, %vm360
        %v362 = vsel %vm361, 65537, 0
        %v363 = vlaneseq
        %v364 = vshrl.u32 %v363, 7
        %v365 = vsub.s32 0, %v364
        %v366 = vrot.slane %v362, %v365
        %vm367 = vcmp.ne.s16.totalorder %v366, 0
        %v368 = vsel %vm367, %v351, 0
        %v369 = vsel %vm367, %v352, 0
        %v370 = vcvt.s32.f32 %v359
        %v371 = vpack.c.bf16 %v370, %v370
        %v372 = vld [vmem:[%s1] sm:$0x3]
        %vm373 = vcmask 261120
        %v375 = vsel %vm373, %v372, 0
        %377 = vmatprep.subr.bf16.mxu0 0
        %378 = vmatpush1.bf16.msra.mxu0 %v368
        %379 = vmatprep.subr.bf16.mxu0 0
        %380 = vmatpush1.bf16.msra.mxu0 %v369
        %381 = vmatprep.subr.bf16.mxu0 0
        %382 = vmatpush1.bf16.msra.mxu0 0
        %383 = vmatprep.subr.bf16.mxu0 0
        %384 = vmatpush1.bf16.msra.mxu0 0
        %385 = vmatprep.subr.bf16.mxu0 0
        %386 = vmatpush1.bf16.msra.mxu0 0
        %387 = vmatprep.subr.bf16.mxu0 0
        %388 = vmatpush1.bf16.msra.mxu0 0
        %389 = vmatprep.subr.bf16.mxu0 0
        %390 = vmatpush1.bf16.msra.mxu0 0
        %391 = vmatprep.subr.bf16.mxu0 0
        %392 = vmatpush1.bf16.msra.mxu0 0
        %393 = vmatprep.subr.bf16.mxu0 0
        %394 = vmatpush1.bf16.msra.mxu0 0
        %395 = vmatprep.subr.bf16.mxu0 0
        %396 = vmatpush1.bf16.msra.mxu0 0
        %397 = vmatprep.subr.bf16.mxu0 0
        %398 = vmatpush1.bf16.msra.mxu0 0
        %399 = vmatprep.subr.bf16.mxu0 0
        %400 = vmatpush1.bf16.msra.mxu0 0
        %401 = vmatprep.subr.bf16.mxu0 0
        %402 = vmatpush1.bf16.msra.mxu0 0
        %403 = vmatprep.subr.bf16.mxu0 0
        %404 = vmatpush1.bf16.msra.mxu0 0
        %405 = vmatprep.subr.bf16.mxu0 0
        %406 = vmatpush1.bf16.msra.mxu0 0
        %407 = vmatprep.subr.bf16.mxu0 0
        %408 = vmatpush1.bf16.msra.mxu0 0
        %409 = vmatprep.mubr.bf16.mxu0 0
        %410 = vmatmul.mubr.bf16.gmra.mrb[0].mxu0 %v375
        %v411 = vpop.f32.mrb[0].mxu0
        %v412 = vadd.f32 0.0, %v411
        %v413 = vpop.f32.mrb[0].mxu0
        %v414 = vpop.f32.mrb[0].mxu0
        %v415 = vpop.f32.mrb[0].mxu0
        %416 = vdwg.mxu0
        %v417 = vunpack.c.l.bf16 %v368
        %v418 = vunpack.c.h.bf16 %v368
        %v419 = vunpack.c.l.bf16 %v369
        %v420 = vunpack.c.h.bf16 %v369
        %v421 = vmul.f32 %v417, %v417
        %v422 = vmul.f32 %v418, %v418
        %v423 = vmul.f32 %v419, %v419
        %v424 = vmul.f32 %v420, %v420
        %v425 = vadd.f32 %v421, %v422
        %v426 = vadd.f32 %v425, %v423
        %v427 = vadd.f32 %v426, %v424
        %v428 = vrot.slane %v427, 4
        %v429 = vadd.f32 %v427, %v428
        %v430 = vrot.slane %v429, 2
        %v431 = vadd.f32 %v429, %v430
        %v432 = vrot.slane %v431, 1
        %v433 = vadd.f32 %v431, %v432
        %v434 = vmul.f32 %v412, 2.0
        %v435 = vsub.f32 %v434, %v433
        %v436 = vld [vmem:[%s3] sm:$0x7]
        %438 = vset.pattern.permute.xlu0 0
        %439 = vperm.xlu0 %438, %v436
        %v440 = vpop.permute.xlu0 %439
        %v442 = vsub.f32 %v435, %v440
        %v443 = vmin.f32 %v442, 0.0
        %v444 = vld [vmem:[%s4] sm:$0x7]
        %446 = vset.pattern.permute.xlu0 0
        %447 = vperm.xlu0 %446, %v444
        %v448 = vpop.permute.xlu0 %447
        %v450 = vmul.f32 %v443, %v448
        %vm451 = vcmask 1042432
        %v452 = vsel %vm451, %v450, -inf
        %v453 = vrot.slane %v452, 4
        %v454 = vmax.f32 %v452, %v453
        %v455 = vrot.slane %v454, 2
        %v456 = vmax.f32 %v454, %v455
        %v457 = vrot.slane %v456, 1
        %v458 = vmax.f32 %v456, %v457
        %v459 = vsub.f32 %v450, %v458
        %v460 = vmul.f32 %v459, 1.442695
        %v461 = vpow.pop %v460
        %v462 = vsel %vm451, %v461, 0.0
        %v463 = vrot.slane %v462, 4
        %v464 = vadd.f32 %v462, %v463
        %v465 = vrot.slane %v464, 2
        %v466 = vadd.f32 %v464, %v465
        %v467 = vrot.slane %v466, 1
        %v468 = vadd.f32 %v466, %v467
        %v469 = vrcp.pop %v468
        %v470 = vmul.f32 %v461, %v469
        %471 = vst [vmem:[%s332] sm:$0x7] %v470
        %v472 = vpack.c.bf16 %v470, %v470
        %v473 = vld [vmem:[#allocation2] sm:$0xff]
        %v474 = vld [vmem:[#allocation2 + $0x8] sm:$0xff]
        %v475 = vld [vmem:[#allocation2 + $0x10] sm:$0xff]
        %v476 = vld [vmem:[#allocation2 + $0x18] sm:$0xff]
        %477 = vmatprep.subr.bf16.mxu0 0
        %478 = vmatpush1.bf16.xpose.msra.mxu0 %v472
        %479 = vmatprep.subr.bf16.mxu0 0
        %480 = vmatpush1.bf16.xpose.msra.mxu0 0
        %481 = vmatprep.subr.bf16.mxu0 0
        %482 = vmatpush1.bf16.xpose.msra.mxu0 0
        %483 = vmatprep.subr.bf16.mxu0 0
        %484 = vmatpush1.bf16.xpose.msra.mxu0 0
        %485 = vmatprep.subr.bf16.mxu0 0
        %486 = vmatpush1.bf16.xpose.msra.mxu0 0
        %487 = vmatprep.subr.bf16.mxu0 0
        %488 = vmatpush1.bf16.xpose.msra.mxu0 0
        %489 = vmatprep.subr.bf16.mxu0 0
        %490 = vmatpush1.bf16.xpose.msra.mxu0 0
        %491 = vmatprep.subr.bf16.mxu0 0
        %492 = vmatpush1.bf16.xpose.msra.mxu0 0
        %493 = vmatprep.subr.bf16.mxu0 0
        %494 = vmatpush1.bf16.xpose.msra.mxu0 0
        %495 = vmatprep.subr.bf16.mxu0 0
        %496 = vmatpush1.bf16.xpose.msra.mxu0 0
        %497 = vmatprep.subr.bf16.mxu0 0
        %498 = vmatpush1.bf16.xpose.msra.mxu0 0
        %499 = vmatprep.subr.bf16.mxu0 0
        %500 = vmatpush1.bf16.xpose.msra.mxu0 0
        %501 = vmatprep.subr.bf16.mxu0 0
        %502 = vmatpush1.bf16.xpose.msra.mxu0 0
        %503 = vmatprep.subr.bf16.mxu0 0
        %504 = vmatpush1.bf16.xpose.msra.mxu0 0
        %505 = vmatprep.subr.bf16.mxu0 0
        %506 = vmatpush1.bf16.xpose.msra.mxu0 0
        %507 = vmatprep.subr.bf16.mxu0 0
        %508 = vmatpush1.bf16.xpose.msra.mxu0 0
        %509 = vmatprep.mubr.bf16.mxu0 0
        %510 = vmatmul.mubr.bf16.gmra.mrb[0].mxu0 %v368
        %v511 = vpop.f32.mrb[0].mxu0
        %v512 = vadd.f32 0.0, %v511
        %v513 = vpop.f32.mrb[0].mxu0
        %v514 = vpop.f32.mrb[0].mxu0
        %v515 = vadd.f32 0.0, %v514
        %v516 = vpop.f32.mrb[0].mxu0
        %517 = vmatprep.mubr.bf16.mxu0 0
        %518 = vmatmul.mubr.bf16.gmra.mrb[0].mxu0 %v369
        %v519 = vpop.f32.mrb[0].mxu0
        %v520 = vadd.f32 0.0, %v519
        %v521 = vpop.f32.mrb[0].mxu0
        %v522 = vpop.f32.mrb[0].mxu0
        %v523 = vadd.f32 0.0, %v522
        %v524 = vpop.f32.mrb[0].mxu0
        %525 = vdwg.mxu0
        %v526 = vadd.f32 %v473, %v512
        %v527 = vadd.f32 %v474, %v515
        %v528 = vadd.f32 %v475, %v520
        %v529 = vadd.f32 %v476, %v523
        %vm530 = vcmask 23552
        %531 = vst.msk [vmem:[#allocation2] sm:$0xff] %vm530, %v526
        %532 = vst.msk [vmem:[#allocation2 + $0x8] sm:$0xff] %vm530, %v527
        %533 = vst.msk [vmem:[#allocation2 + $0x10] sm:$0xff] %vm530, %v528
        %534 = vst.msk [vmem:[#allocation2 + $0x18] sm:$0xff] %vm530, %v529
        %v535 = vld [vmem:[#allocation3] sm:$0x1]
        %536 = vmatprep.subr.bf16.mxu0 0
        %537 = vmatpush1.bf16.xpose.msra.mxu0 %v472
        %538 = vmatprep.subr.bf16.mxu0 0
        %539 = vmatpush1.bf16.xpose.msra.mxu0 0
        %540 = vmatprep.subr.bf16.mxu0 0
        %541 = vmatpush1.bf16.xpose.msra.mxu0 0
        %542 = vmatprep.subr.bf16.mxu0 0
        %543 = vmatpush1.bf16.xpose.msra.mxu0 0
        %544 = vmatprep.subr.bf16.mxu0 0
        %545 = vmatpush1.bf16.xpose.msra.mxu0 0
        %546 = vmatprep.subr.bf16.mxu0 0
        %547 = vmatpush1.bf16.xpose.msra.mxu0 0
        %548 = vmatprep.subr.bf16.mxu0 0
        %549 = vmatpush1.bf16.xpose.msra.mxu0 0
        %550 = vmatprep.subr.bf16.mxu0 0
        %551 = vmatpush1.bf16.xpose.msra.mxu0 0
        %552 = vmatprep.subr.bf16.mxu0 0
        %553 = vmatpush1.bf16.xpose.msra.mxu0 0
        %554 = vmatprep.subr.bf16.mxu0 0
        %555 = vmatpush1.bf16.xpose.msra.mxu0 0
        %556 = vmatprep.subr.bf16.mxu0 0
        %557 = vmatpush1.bf16.xpose.msra.mxu0 0
        %558 = vmatprep.subr.bf16.mxu0 0
        %559 = vmatpush1.bf16.xpose.msra.mxu0 0
        %560 = vmatprep.subr.bf16.mxu0 0
        %561 = vmatpush1.bf16.xpose.msra.mxu0 0
        %562 = vmatprep.subr.bf16.mxu0 0
        %563 = vmatpush1.bf16.xpose.msra.mxu0 0
        %564 = vmatprep.subr.bf16.mxu0 0
        %565 = vmatpush1.bf16.xpose.msra.mxu0 0
        %566 = vmatprep.subr.bf16.mxu0 0
        %567 = vmatpush1.bf16.xpose.msra.mxu0 0
        %568 = vmatprep.mubr.bf16.mxu0 0
        %569 = vmatmul.mubr.bf16.gmra.mrb[0].mxu0 %v371
        %v570 = vpop.f32.mrb[0].mxu0
        %v571 = vadd.f32 0.0, %v570
        %v572 = vpop.f32.mrb[0].mxu0
        %v573 = vpop.f32.mrb[0].mxu0
        %v574 = vpop.f32.mrb[0].mxu0
        %575 = vdwg.mxu0
        %v576 = vadd.f32 %v535, %v571
        %vm577 = vcmask 16384
        %578 = vst.msk [vmem:[#allocation3] sm:$0x1] %vm577, %v576
        // Predicated region
        $region53: #{tpu_custom_call.1} parent=43 // pred_check
          %p579 = pneg %p336
        $region54: #{tpu_custom_call.1} parent=43 // pred_check_branch
          %581 = sbr.rel (%p579) target = $region56
        $region55: #{tpu_custom_call.1} parent=43 // pred_region
          %v582 = vld [vmem:[#allocation3] sm:$0x1]
          %v583 = vmax.f32 %v582, 1e-05
          %v584 = vrcp.pop %v583
          %v585 = vmul.f32 1.0, %v584
          %v586 = vld [vmem:[#allocation2] sm:$0xff]
          %v587 = vld [vmem:[#allocation2 + $0x8] sm:$0xff]
          %v588 = vld [vmem:[#allocation2 + $0x10] sm:$0xff]
          %v589 = vld [vmem:[#allocation2 + $0x18] sm:$0xff]
          %v590 = vld [vmem:[%s5] sm:$0x1]
          %v591 = vmul.f32 %v585, %v590
          %v593 = vlaneseq
          %v594 = vshrl.u32 %v593, 7
          %v595 = vsub.s32 0, %v594
          %v596 = vrot.slane %v591, %v595
          %v598 = vmul.f32 %v586, %v596
          %v599 = vmul.f32 %v587, %v596
          %v600 = vmul.f32 %v588, %v596
          %v601 = vmul.f32 %v589, %v596
          %v602 = vld [vmem:[%s2] sm:$0xff]
          %v603 = vld [vmem:[%s2 + $0x8] sm:$0xff]
          %v604 = vld [vmem:[%s2 + $0x10] sm:$0xff]
          %v605 = vld [vmem:[%s2 + $0x18] sm:$0xff]
          %v606 = vsub.f32 %v598, %v602
          %v607 = vsub.f32 %v599, %v603
          %v608 = vsub.f32 %v600, %v604
          %v609 = vsub.f32 %v601, %v605
          %v610 = vmul.f32 %v606, %v606
          %v611 = vmul.f32 %v607, %v607
          %v612 = vmul.f32 %v608, %v608
          %v613 = vmul.f32 %v609, %v609
          %v614 = vsel %vm530, %v610, 0.0
          %v615 = vsel %vm530, %v611, 0.0
          %v616 = vadd.f32 %v614, %v615
          %v617 = vsel %vm530, %v612, 0.0
          %v618 = vadd.f32 %v616, %v617
          %v619 = vsel %vm530, %v613, 0.0
          %v620 = vadd.f32 %v618, %v619
          %v621 = vrot.slane %v620, 4
          %v622 = vadd.f32 %v620, %v621
          %v623 = vrot.slane %v622, 2
          %v624 = vadd.f32 %v622, %v623
          %v625 = vrot.slane %v624, 1
          %v626 = vadd.f32 %v624, %v625
          %v627 = vmax.f32 %v626, 1e-24
          %v628 = vrsqrt.pop %v627
          %v629 = vmul.f32 %v606, %v628
          %v630 = vmul.f32 %v607, %v628
          %v631 = vmul.f32 %v608, %v628
          %v632 = vmul.f32 %v609, %v628
          %633 = vst.msk [vmem:[%s325] sm:$0xff] %vm530, %v629
          %634 = vst.msk [vmem:[%s325 + $0x8] sm:$0xff] %vm530, %v630
          %635 = vst.msk [vmem:[%s325 + $0x10] sm:$0xff] %vm530, %v631
          %636 = vst.msk [vmem:[%s325 + $0x18] sm:$0xff] %vm530, %v632
        $region56: #{tpu_custom_call.1} parent=43 // pred_fallthru
          _
        %p637 = scmp.lt.s32.totalorder %s26, 1
        %s638 = scalar_select %p637, %s26, 1
        %s639 = smul.addr %s638, 4
        %s640 = smul.addr %s639, 8
        %s641 = scalar_lea.vmem %s6, %s640
        %p642 = scmp.lt.s32.totalorder %s26, 1
        %s643 = scalar_select %p642, %s26, 1
        %p644 = scmp.lt.s32.totalorder %s27, 0
        %s645 = scalar_select %p644, %s27, 0
        %s646 = sadd.s32 %s645, %s643
        %s647 = smul.addr %s646, 4
        %s648 = scalar_lea.vmem %s7, %s647
        // Predicated region
        $region57: #{tpu_custom_call.1} parent=43 // pred_check
          %p649 = pneg %p185
        $region58: #{tpu_custom_call.1} parent=43 // pred_check_branch
          %651 = sbr.rel (%p649) target = $region60
        $region59: #{tpu_custom_call.1} parent=43 // pred_region
          _
        $region60: #{tpu_custom_call.1} parent=43 // pred_fallthru
          _
        // Predicated region
        $region61: #{tpu_custom_call.1} parent=43 // pred_check
          %p652 = pneg %p213
        $region62: #{tpu_custom_call.1} parent=43 // pred_check_branch
          %654 = sbr.rel (%p652) target = $region64
        $region63: #{tpu_custom_call.1} parent=43 // pred_region
          _
        $region64: #{tpu_custom_call.1} parent=43 // pred_fallthru
          _
      $region44: #{tpu_custom_call.1} parent=5 // pred_fallthru
        _
      %p655 = scmp.le.s32.totalorder 2, %s17
      // Predicated region
      $region65: #{tpu_custom_call.1} parent=5 // pred_check
        %p656 = pneg %p655
      $region66: #{tpu_custom_call.1} parent=5 // pred_check_branch
        %658 = sbr.rel (%p656) target = $region68
      $region67: #{tpu_custom_call.1} parent=5 // pred_region
        %s659 = ssub.s32 %s17, 2
        // Predicated region
        $region69: #{tpu_custom_call.1} parent=67 // pred_check
          %p660 = pneg %p191
        $region70: #{tpu_custom_call.1} parent=67 // pred_check_branch
          %662 = sbr.rel (%p660) target = $region72
        $region71: #{tpu_custom_call.1} parent=67 // pred_region
          %p663 = scmp.lt.s32.totalorder %s28, 1
          %s664 = scalar_select %p663, %s28, 1
          %s665 = smul.addr %s664, 4
          %s666 = smul.addr %s665, 8
          %s667 = scalar_lea.vmem %s6, %s666
        $region72: #{tpu_custom_call.1} parent=67 // pred_fallthru
          _
        // Predicated region
        $region73: #{tpu_custom_call.1} parent=67 // pred_check
          %p668 = pneg %p219
        $region74: #{tpu_custom_call.1} parent=67 // pred_check_branch
          %670 = sbr.rel (%p668) target = $region76
        $region75: #{tpu_custom_call.1} parent=67 // pred_region
          %p671 = scmp.lt.s32.totalorder %s28, 1
          %s672 = scalar_select %p671, %s28, 1
          %p673 = scmp.lt.s32.totalorder %s29, 0
          %s674 = scalar_select %p673, %s29, 0
          %s675 = sadd.s32 %s674, %s672
          %s676 = smul.addr %s675, 4
          %s677 = scalar_lea.vmem %s7, %s676
        $region76: #{tpu_custom_call.1} parent=67 // pred_fallthru
          _
      $region68: #{tpu_custom_call.1} parent=5 // pred_fallthru
        _
    $region6: #{tpu_custom_call.1} parent=1 // loop_footer
      %s21 = sadd.s32 1, %s17
    $region7: #{tpu_custom_call.1} parent=1 // loop_footer_branch
      %16 = sbr.rel target = $region3
    $region8: #{tpu_custom_call.1} parent=1 // loop_exit
      _
    %678 = vsyncpa [#allocation5], 1
    %s679 = scalar_lea.sflag [#allocation5], 1
    %680 = vsyncpa %s679, 1

</llo_original>
